<compile_context>
chip_gen: v7x
topology: tpu7x:2x2x1
jax: 0.10.0
libtpu: 0.0.40
codegen_flags: <defaults>
</compile_context>

<pallas_src>
import jax
import jax.numpy as jnp
from jax.experimental import pallas as pl
from jax.experimental.pallas import tpu as pltpu

_LANES = 512        # lane-dense last dim (multiple of 128 -> full-width, unmasked stores)
_TILE_ROWS = 2048   # 2048 * 512 * 4B = 4 MiB per f32 block; ~16 MiB VMEM double-buffered


def _dummy_layer_kernel(bias_ref, x_ref, o_ref):
    # bias_ref: (1,) float32 in SMEM (the dummy_bias parameter).
    b = bias_ref[0].astype(x_ref.dtype)          # mirror torch's .to(x) cast
    # Keep the exact (x + b) - b ordering: not bit-identical to x when |b| >> |x|,
    # so do NOT fold it away.
    # NOTE: on a partial last block the out-of-bounds rows of x_ref hold
    # unspecified data; that is fine here because the op is purely elementwise
    # and Pallas masks the corresponding output stores.  Do not rely on those
    # rows if this kernel is ever extended with cross-row ops.
    o_ref[...] = (x_ref[...] + b) - b


def dummy_layer(x: jax.Array, dummy_bias: jax.Array) -> jax.Array:
    """Pallas equivalent of DummyLayer.forward. x: any shape; dummy_bias: (1,) float32."""
    orig_shape = x.shape
    dtype = x.dtype
    n = x.size

    # Flatten to a lane-dense 2-D slab (rows, _LANES).  Only the sub-512-element
    # lane tail is ever padded; the row axis is left at its natural extent and
    # the grid handles the partial last block.
    rows = pl.cdiv(n, _LANES)
    lane_pad = rows * _LANES - n

    xf = x.reshape(-1)
    if lane_pad:
        xf = jnp.pad(xf, (0, lane_pad))          # < 512 elements, negligible
    x2d = xf.reshape(rows, _LANES)

    tile_rows = min(_TILE_ROWS, rows)            # small inputs: single full-extent block
    grid = (pl.cdiv(rows, tile_rows),)           # partial last block allowed (masked stores)
    bias32 = dummy_bias.reshape(-1).astype(jnp.float32)

    itemsize = jnp.dtype(dtype).itemsize
    cost = pl.CostEstimate(
        flops=2 * rows * _LANES,                 # one add + one sub per element
        transcendentals=0,
        bytes_accessed=2 * rows * _LANES * itemsize,
    )

    out2d = pl.pallas_call(
        _dummy_layer_kernel,
        out_shape=jax.ShapeDtypeStruct((rows, _LANES), dtype),
        grid_spec=pl.GridSpec(
            grid=grid,
            in_specs=[
                # Untiled SMEM scalar — resident for the whole grid, no per-step DMA.
                pl.BlockSpec(memory_space=pltpu.MemorySpace.SMEM),
                # Lane-dense, pipelined row tiles of x.
                pl.BlockSpec((tile_rows, _LANES), lambda i: (i, 0)),
            ],
            out_specs=pl.BlockSpec((tile_rows, _LANES), lambda i: (i, 0)),
        ),
        compiler_params=pltpu.CompilerParams(
            dimension_semantics=("parallel",),   # shard row tiles across TCs on v7x
            vmem_limit_bytes=48 * 1024 * 1024,   # > v5e's 16 MiB default, < v7x's 64 MiB physical
        ),
        input_output_aliases={1: 0},             # out2d reuses x2d's HBM buffer (in-place op)
        cost_estimate=cost,
    )(bias32, x2d)

    out = out2d.reshape(-1)
    if lane_pad:
        out = out[:n]
    return out.reshape(orig_shape)


if __name__ == "__main__":
    key = jax.random.PRNGKey(0)
    # Small NCHW input consistent with a generic torch module input.
    x = jax.random.normal(key, (2, 4, 16, 16), dtype=jnp.float32)

    # Deterministic parameter init: torch.ones(1, dtype=float32)
    dummy_bias = jnp.ones((1,), dtype=jnp.float32)

    out = dummy_layer(x, dummy_bias)
    out = jax.block_until_ready(out)

    # Reference: (x + b) - b computed the same way in plain JAX.
    b = dummy_bias.astype(x.dtype)[0]
    ref = (x + b) - b

    assert out.shape == x.shape and out.dtype == x.dtype
    assert bool(jnp.array_equal(out, ref))            # bit-exact: same arithmetic order
    assert jnp.allclose(out, x, atol=1e-6)            # forward is (numerically) an identity

    print("KERNEL_OK")
</pallas_src>

<mosaic_0001>
module attributes {stable_mosaic.version = 11 : i64} {
  func.func @_dummy_layer_kernel(%arg0: i32, %arg1: memref<1xf32, #tpu.memory_space<smem>>, %arg2: memref<4x512xf32, #tpu.memory_space<vmem>>, %arg3: memref<4x512xf32, #tpu.memory_space<vmem>>) attributes {dimension_semantics = [#tpu.dimension_semantics<parallel>], iteration_bounds = array<i64: 1>, scalar_prefetch = 0 : i64, scratch_operands = 0 : i64, tpu.core_type = #tpu.core_type<tc>, window_params = [{transform_indices = @transform_0, window_bounds = array<i64: 1>}, {transform_indices = @transform_1, window_bounds = array<i64: 4, 512>}, {transform_indices = @transform_2, window_bounds = array<i64: 4, 512>}]} {
    %c0 = arith.constant 0 : index
    %0 = memref.load %arg1[%c0] : memref<1xf32, #tpu.memory_space<smem>>
    %c0_0 = arith.constant 0 : index
    %c0_1 = arith.constant 0 : index
    %1 = vector.load %arg2[%c0_0, %c0_1] : memref<4x512xf32, #tpu.memory_space<vmem>>, vector<4x512xf32>
    %2 = vector.broadcast %0 : f32 to vector<4x512xf32>
    %3 = arith.addf %1, %2 : vector<4x512xf32>
    %4 = vector.broadcast %0 : f32 to vector<4x512xf32>
    %5 = arith.subf %3, %4 : vector<4x512xf32>
    %c0_2 = arith.constant 0 : index
    %c0_3 = arith.constant 0 : index
    %6 = vector.load %arg3[%c0_2, %c0_3] : memref<4x512xf32, #tpu.memory_space<vmem>>, vector<4x512xf32>
    tpu.vector_store %arg3[%c0_2, %c0_3], %5 {strides = array<i32>} : memref<4x512xf32, #tpu.memory_space<vmem>>, vector<4x512xf32>,
    return
  }
  func.func @transform_0(%arg0: i32) -> i32 {
    %c0_i32 = arith.constant 0 : i32
    %c0_i32_0 = arith.constant 0 : i32
    return %c0_i32 : i32
  }
  func.func @transform_1(%arg0: i32) -> (i32, i32) {
    %c0_i32 = arith.constant 0 : i32
    %c0_i32_0 = arith.constant 0 : i32
    return %arg0, %c0_i32 : i32, i32
  }
  func.func @transform_2(%arg0: i32) -> (i32, i32) {
    %c0_i32 = arith.constant 0 : i32
    %c0_i32_0 = arith.constant 0 : i32
    return %arg0, %c0_i32 : i32, i32
  }
}

</mosaic_0001>

<llo_original>
// kernel: tpu_custom_call.1
$region0: #{tpu_custom_call.1}
  #allocation0 [shape = 'u32[]', space=smem, size = 0x4, offset = 0x4, fixed_abs, tag = 'smem constant byte address 0x4 - core index']
  #allocation1 [shape = 'u32[144,128]{1,0:T(1,128)}', space=vmem, size = 0x12000, scoped, tag = 'internal scratch']
  #allocation2 [shape = 'f32[1]{0:T(128)S(6)}', space=smem, size = 0x200, scoped, tag = 'scoped memory for tpu_custom_call.1']
  %s0 = inlined_call_operand.<no memory space> [shape: f32[1], index: 0, kind: input, shape index: {}]
  %s1 = inlined_call_operand.hbm [shape: f32[4,512], index: 1, kind: input, shape index: {}, may-alias: {1,2}]
  %s2 = inlined_call_operand.hbm [shape: f32[4,512], index: 2, kind: output, shape index: {}, may-alias: {1,2}]
  %s3 = sld [smem:[#allocation0]]
  $region22: #{tpu_custom_call.1} parent=0
    _
  %s5 = ssub.s32 1, %s3
  %s6 = scalar_select 0, %s5, %s3
  %7 = sst [smem:[#allocation2]] %s0
  $region1: #{tpu_custom_call.1} parent=0
    #allocation3 [shape = 'u8[8192]{0}', space=vmem, size = 0x2000, scoped, tag = 'input window, operand 1, single buffered']
    #allocation4 [shape = 's32[1]{0}', space=sflag, size = 0x4, scoped, tag = 'scoped memory for tpu_custom_call.1']
    #allocation5 [shape = 's32[1]{0}', space=sflag, size = 0x4, scoped, tag = 'scoped memory for tpu_custom_call.1']
    #allocation6 [shape = 'u8[8192]{0}', space=vmem, size = 0x2000, scoped, tag = 'output window, operand 0, single buffered']
    %8 = vsyncpa [#allocation4], 0
    %9 = vsyncpa [#allocation5], 0
    // Predicated region
    $region2: #{tpu_custom_call.1} parent=1 // pred_check
      _
    $region3: #{tpu_custom_call.1} parent=1 // pred_check_branch
      %11 = sbr.rel (0) target = $region5
    $region4: #{tpu_custom_call.1} parent=1 // pred_region
      _
    $region5: #{tpu_custom_call.1} parent=1 // pred_fallthru
      _
    // Predicated region
    $region6: #{tpu_custom_call.1} parent=1 // pred_check
      _
    $region7: #{tpu_custom_call.1} parent=1 // pred_check_branch
      %13 = sbr.rel (0) target = $region9
    $region8: #{tpu_custom_call.1} parent=1 // pred_region
      %s15 = ssub.s32 256, 256
      %16 = vsyncadd [#allocation4], %s15
      %s18 = sshll.u32 [#allocation3], 4
      %s19 = int_to_ptr.vmem [resolvable:$true] %s18
      %21 = dma.hbm_to_vmem [thread:$0]  %s1, 256, %s19, [#allocation4]
    $region9: #{tpu_custom_call.1} parent=1 // pred_fallthru
      _
    // Predicated region
    $region10: #{tpu_custom_call.1} parent=1 // pred_check
      _
    $region11: #{tpu_custom_call.1} parent=1 // pred_check_branch
      %23 = sbr.rel (0) target = $region13
    $region12: #{tpu_custom_call.1} parent=1 // pred_region
      %24 = dma.done [#allocation4], 256
    $region13: #{tpu_custom_call.1} parent=1 // pred_fallthru
      _
    %s25 = sld [smem:[#allocation2]]
    %v26 = vld [vmem:[#allocation3] sm:$0xff]
    %v27 = vld [vmem:[#allocation3 + $0x8] sm:$0xff]
    %v28 = vstv %s25
    %v29 = vadd.f32 %v26, %v28
    %v30 = vadd.f32 %v27, %v28
    %v31 = vsub.f32 %v29, %v28
    %v32 = vsub.f32 %v30, %v28
    %33 = vst [vmem:[#allocation6] sm:$0xff] %v31
    %34 = vst [vmem:[#allocation6 + $0x8] sm:$0xff] %v32
    // Predicated region
    $region14: #{tpu_custom_call.1} parent=1 // pred_check
      _
    $region15: #{tpu_custom_call.1} parent=1 // pred_check_branch
      %36 = sbr.rel (0) target = $region17
    $region16: #{tpu_custom_call.1} parent=1 // pred_region
      %s38 = ssub.s32 256, 256
      %39 = vsyncadd [#allocation5], %s38
      %s41 = sshll.u32 [#allocation6], 4
      %s42 = int_to_ptr.vmem [resolvable:$true] %s41
      %44 = dma.vmem_to_hbm [thread:$0]  %s42, 256, %s2, [#allocation5]
    $region17: #{tpu_custom_call.1} parent=1 // pred_fallthru
      _
    // Predicated region
    $region18: #{tpu_custom_call.1} parent=1 // pred_check
      _
    $region19: #{tpu_custom_call.1} parent=1 // pred_check_branch
      %46 = sbr.rel (0) target = $region21
    $region20: #{tpu_custom_call.1} parent=1 // pred_region
      %47 = dma.done [#allocation5], 256
    $region21: #{tpu_custom_call.1} parent=1 // pred_fallthru
      _
    %48 = vsyncpa [#allocation4], 1
    %49 = vsyncpa [#allocation5], 1

</llo_original>
